<compile_context>
chip_gen: v7x
topology: tpu7x:2x2x1
jax: 0.10.0
libtpu: 0.0.40
codegen_flags: <defaults>
</compile_context>

<pallas_src>
import functools

import jax
import jax.numpy as jnp
from jax import lax
from jax.experimental import pallas as pl
from jax.experimental.pallas import tpu as pltpu

LN_EPS = 1e-12             # BERT default layer_norm_eps
_INV_SQRT2 = 0.7071067811865476


def _round_up(a, b):
    return ((a + b - 1) // b) * b


def _lm_head_kernel(x_hbm, w1_ref, b1_ref, gamma_ref, beta_ref, w2_ref, dbias_ref,
                    o_ref, h_cache, x_vmem, dma_sem, *, tm):
    j = pl.program_id(0)                       # vocab tile (outer)
    i = pl.program_id(1)                       # row tile   (inner)
    row = pl.multiple_of(i * tm, tm)

    # --- transform (dense + exact GELU + LayerNorm): once per row tile, at j == 0.
    # The result for ALL row tiles of this chunk stays cached in VMEM (h_cache),
    # so W2 only has to be streamed from HBM once per chunk.
    @pl.when(j == 0)
    def _():
        cp = pltpu.make_async_copy(x_hbm.at[pl.ds(row, tm), :], x_vmem, dma_sem)
        cp.start()
        cp.wait()
        h = jnp.dot(x_vmem[...], w1_ref[...],
                    preferred_element_type=jnp.float32)              # (tm, H) f32 acc
        h = h + b1_ref[...].astype(jnp.float32)                      # (1, H) broadcast
        # exact GELU: 0.5 * x * (1 + erf(x / sqrt(2)))
        h = 0.5 * h * (1.0 + lax.erf(h * _INV_SQRT2))
        mean = jnp.mean(h, axis=-1, keepdims=True)
        var = jnp.mean((h - mean) * (h - mean), axis=-1, keepdims=True)
        h = (h - mean) * lax.rsqrt(var + LN_EPS)
        h = h * gamma_ref[...].astype(jnp.float32) + beta_ref[...].astype(jnp.float32)
        h_cache[pl.ds(row, tm), :] = h.astype(h_cache.dtype)

    # --- decoder: linear with (tied) bias, streaming over vocab tiles.
    out = jnp.dot(h_cache[pl.ds(row, tm), :], w2_ref[...],
                  preferred_element_type=jnp.float32)                # (tm, tv)
    out = out + dbias_ref[...].astype(jnp.float32)                   # (1, tv) broadcast
    o_ref[...] = out.astype(o_ref.dtype)


def _lm_head_chunk(xc, w1, b1, gamma, beta, w2, dbias, *, tm, tv, out_dtype):
    """One row super-chunk. xc: (Mc, H) padded to tm-multiple; w2: (H, V_pad)."""
    Mc, H = xc.shape
    V_pad = w2.shape[1]
    op_bytes = jnp.dtype(xc.dtype).itemsize
    out_bytes = jnp.dtype(out_dtype).itemsize

    grid = (V_pad // tv, Mc // tm)             # j outer (vocab), i inner (rows)

    # Size the VMEM limit from actual need (double buffers counted), with a
    # generation-aware physical cap (important on v7x's 64 MiB VMEM).
    vmem_need = (Mc * H * op_bytes                  # h cache scratch
                 + tm * H * op_bytes                # x staging scratch
                 + 2 * H * H * op_bytes             # W1 (resident, double-buffered alloc)
                 + 2 * 3 * H * 4                    # b1 / gamma / beta
                 + 2 * H * tv * op_bytes            # W2 tile
                 + 2 * tv * 4                       # decoder bias tile
                 + 2 * tm * tv * out_bytes)         # output tile
    vmem_limit = max(32 << 20, int(vmem_need * 1.25) + (4 << 20))
    try:
        phys = pltpu.get_tpu_info().vmem_capacity_bytes
        vmem_limit = min(vmem_limit, max(phys - (8 << 20), 32 << 20))
    except Exception:
        vmem_limit = min(vmem_limit, 96 << 20)

    # W2 streamed exactly once per chunk (no grid[i] factor any more).
    cost = pl.CostEstimate(
        flops=2 * Mc * H * H + 2 * Mc * H * V_pad,
        transcendentals=Mc * H,
        bytes_accessed=(Mc * H * op_bytes           # x
                        + H * H * op_bytes          # W1
                        + H * V_pad * op_bytes      # W2 (once)
                        + V_pad * 4                 # decoder bias
                        + Mc * V_pad * out_bytes),  # logits
    )

    kernel = functools.partial(_lm_head_kernel, tm=tm)
    return pl.pallas_call(
        kernel,
        out_shape=jax.ShapeDtypeStruct((Mc, V_pad), out_dtype),
        grid_spec=pltpu.PrefetchScalarGridSpec(
            num_scalar_prefetch=0,
            grid=grid,
            in_specs=[
                pl.BlockSpec(memory_space=pl.ANY),             # x chunk in HBM, manual DMA
                pl.BlockSpec((H, H), lambda j, i: (0, 0)),     # transform weight (resident)
                pl.BlockSpec((1, H), lambda j, i: (0, 0)),     # transform bias
                pl.BlockSpec((1, H), lambda j, i: (0, 0)),     # layernorm gamma
                pl.BlockSpec((1, H), lambda j, i: (0, 0)),     # layernorm beta
                pl.BlockSpec((H, tv), lambda j, i: (0, j)),    # W2 tile: depends on j only
                pl.BlockSpec((1, tv), lambda j, i: (0, j)),    # decoder bias tile
            ],
            out_specs=pl.BlockSpec((tm, tv), lambda j, i: (i, j)),
            scratch_shapes=[
                pltpu.VMEM((Mc, H), xc.dtype),                 # full-chunk transform cache
                pltpu.VMEM((tm, H), xc.dtype),                 # x staging buffer
                pltpu.SemaphoreType.DMA,
            ]),
        compiler_params=pltpu.CompilerParams(
            # j carries the h cache -> arbitrary; row tiles are independent ->
            # parallel (v7x megacore splits rows across its 2 TensorCores).
            dimension_semantics=("arbitrary", "parallel"),
            vmem_limit_bytes=vmem_limit),
        cost_estimate=cost,
    )(xc, w1, b1, gamma, beta, w2, dbias)


@functools.partial(jax.jit, static_argnames=("tm", "tv", "matmul_dtype", "out_dtype",
                                             "h_cache_budget_bytes"))
def bert_lm_prediction_head(x, w1, b1, gamma, beta, w2, dbias, *,
                            tm=512, tv=2048,
                            matmul_dtype=jnp.bfloat16,
                            out_dtype=jnp.bfloat16,
                            h_cache_budget_bytes=24 * 1024 * 1024):
    """x: [B, S, H]; w1: [H, H]; b1,gamma,beta: [H]; w2: [H, V]; dbias: [V] -> [B, S, V].

    Logits are emitted in `out_dtype` (bf16 by default for HBM/VMEM savings);
    pass out_dtype=jnp.float32 for full-precision logits.
    """
    B, S, H = x.shape
    V = w2.shape[1]
    M = B * S
    op_bytes = jnp.dtype(matmul_dtype).itemsize

    # Hardware-aligned tiles (shrink for tiny inputs; rows rounded to 16 for bf16 packing).
    tm_eff = min(tm, _round_up(M, 16))
    tv_eff = min(tv, _round_up(V, 128))
    V_pad = _round_up(V, tv_eff)

    # Rows per super-chunk: the whole chunk's transform output is cached in VMEM,
    # so W2 streams from HBM exactly once per chunk.
    rows_fit = max(tm_eff, (h_cache_budget_bytes // (H * op_bytes)) // tm_eff * tm_eff)
    chunk_rows = min(_round_up(M, tm_eff), rows_fit)

    # Cast matmul operands to bf16 (f32 accumulation inside the kernel).
    x2 = x.reshape(M, H).astype(matmul_dtype)
    w1_c = w1.astype(matmul_dtype)
    w2_c = w2.astype(matmul_dtype)
    dbias_c = dbias.astype(jnp.float32)
    if V_pad != V:
        w2_c = jnp.pad(w2_c, ((0, 0), (0, V_pad - V)))
        dbias_c = jnp.pad(dbias_c, (0, V_pad - V))

    # 2-D (lane-major) views of the 1-D parameter vectors, kept in f32.
    b1_2 = b1.astype(jnp.float32).reshape(1, H)
    gamma_2 = gamma.astype(jnp.float32).reshape(1, H)
    beta_2 = beta.astype(jnp.float32).reshape(1, H)
    dbias_2 = dbias_c.reshape(1, V_pad)

    outs = []
    for r0 in range(0, M, chunk_rows):
        rows = min(chunk_rows, M - r0)
        mc_pad = _round_up(rows, tm_eff)
        xc = x2[r0:r0 + rows]
        if mc_pad != rows:
            xc = jnp.pad(xc, ((0, mc_pad - rows), (0, 0)))
        out_c = _lm_head_chunk(xc, w1_c, b1_2, gamma_2, beta_2, w2_c, dbias_2,
                               tm=tm_eff, tv=tv_eff, out_dtype=out_dtype)
        outs.append(out_c[:rows])
    out = outs[0] if len(outs) == 1 else jnp.concatenate(outs, axis=0)
    out = out[:, :V]
    return out.reshape(B, S, V)


def _reference(x, w1, b1, gamma, beta, w2, dbias,
               matmul_dtype=jnp.bfloat16, out_dtype=jnp.bfloat16):
    """Matching-precision reference (bf16 matmul operands, f32 accumulation / LN)."""
    xb = x.astype(matmul_dtype)
    w1b = w1.astype(matmul_dtype)
    w2b = w2.astype(matmul_dtype)
    h = jnp.einsum("bsh,hk->bsk", xb, w1b,
                   preferred_element_type=jnp.float32) + b1.astype(jnp.float32)
    h = 0.5 * h * (1.0 + lax.erf(h * _INV_SQRT2))
    mean = jnp.mean(h, axis=-1, keepdims=True)
    var = jnp.mean((h - mean) ** 2, axis=-1, keepdims=True)
    h = (h - mean) * lax.rsqrt(var + LN_EPS)
    h = h * gamma.astype(jnp.float32) + beta.astype(jnp.float32)
    out = jnp.einsum("bsh,hv->bsv", h.astype(matmul_dtype), w2b,
                     preferred_element_type=jnp.float32) + dbias.astype(jnp.float32)
    return out.astype(out_dtype)


if __name__ == "__main__":
    # Small config: batch=2, seq=8, hidden=128, correct_vocab_size=256.
    B, S, H, V = 2, 8, 128, 256

    key = jax.random.PRNGKey(0)
    k_x, k_w1, k_b1, k_g, k_bt, k_w2, k_db = jax.random.split(key, 7)

    x = jax.random.normal(k_x, (B, S, H), dtype=jnp.float32)
    # Parameters (deterministic synthetic init). Weights stored as [in, out].
    w1 = jax.random.normal(k_w1, (H, H), dtype=jnp.float32) * 0.02
    b1 = jax.random.normal(k_b1, (H,), dtype=jnp.float32) * 0.02
    gamma = 1.0 + jax.random.normal(k_g, (H,), dtype=jnp.float32) * 0.02
    beta = jax.random.normal(k_bt, (H,), dtype=jnp.float32) * 0.02
    w2 = jax.random.normal(k_w2, (H, V), dtype=jnp.float32) * 0.02
    dbias = jnp.zeros((V,), dtype=jnp.float32)  # module inits tied bias to zeros

    out = bert_lm_prediction_head(x, w1, b1, gamma, beta, w2, dbias)
    out = jax.block_until_ready(out)

    ref = _reference(x, w1, b1, gamma, beta, w2, dbias)
    assert out.shape == (B, S, V), out.shape
    err = float(jnp.max(jnp.abs(out.astype(jnp.float32) - ref.astype(jnp.float32))))
    assert jnp.allclose(out.astype(jnp.float32), ref.astype(jnp.float32),
                        atol=2e-2, rtol=2e-2), err

    print("KERNEL_OK")
</pallas_src>

<mosaic_0001>
module attributes {stable_mosaic.version = 11 : i64} {
  func.func @_lm_head_kernel(%arg0: i32, %arg1: i32, %arg2: memref<16x128xbf16, #tpu.memory_space<any>>, %arg3: memref<128x128xbf16, #tpu.memory_space<vmem>>, %arg4: memref<1x128xf32, #tpu.memory_space<vmem>>, %arg5: memref<1x128xf32, #tpu.memory_space<vmem>>, %arg6: memref<1x128xf32, #tpu.memory_space<vmem>>, %arg7: memref<128x256xbf16, #tpu.memory_space<vmem>>, %arg8: memref<1x256xf32, #tpu.memory_space<vmem>>, %arg9: memref<16x256xbf16, #tpu.memory_space<vmem>>, %arg10: memref<16x128xbf16, #tpu.memory_space<vmem>>, %arg11: memref<16x128xbf16, #tpu.memory_space<vmem>>, %arg12: memref<!tpu.dma_semaphore, #tpu.memory_space<semaphore_mem>>) attributes {dimension_semantics = [#tpu.dimension_semantics<arbitrary>, #tpu.dimension_semantics<parallel>], iteration_bounds = array<i64: 1, 1>, scalar_prefetch = 0 : i64, scratch_operands = 3 : i64, tpu.core_type = #tpu.core_type<tc>, window_params = [{}, {pipeline_mode = #tpu.pipeline_mode<synchronous>, transform_indices = @transform_1, window_bounds = array<i64: 128, 128>}, {pipeline_mode = #tpu.pipeline_mode<synchronous>, transform_indices = @transform_2, window_bounds = array<i64: 1, 128>}, {pipeline_mode = #tpu.pipeline_mode<synchronous>, transform_indices = @transform_3, window_bounds = array<i64: 1, 128>}, {pipeline_mode = #tpu.pipeline_mode<synchronous>, transform_indices = @transform_4, window_bounds = array<i64: 1, 128>}, {transform_indices = @transform_5, window_bounds = array<i64: 128, 256>}, {transform_indices = @transform_6, window_bounds = array<i64: 1, 256>}, {transform_indices = @transform_7, window_bounds = array<i64: 16, 256>}]} {
    %c16_i32 = arith.constant 16 : i32
    %0 = arith.muli %arg1, %c16_i32 : i32
    %1 = tpu.assume_multiple %0, 16 : i32
    %c0_i32 = arith.constant 0 : i32
    %2 = arith.cmpi eq, %arg0, %c0_i32 : i32
    %3 = arith.extui %2 : i1 to i32
    %c0_i32_0 = arith.constant 0 : i32
    %4 = arith.cmpi ne, %3, %c0_i32_0 : i32
    scf.if %4 {
      %c0_i32_7 = arith.constant 0 : i32
      %14 = tpu.memref_slice %arg2[%1, %c0_i32_7] : memref<16x128xbf16, #tpu.memory_space<any>> -> memref<16x128xbf16, #tpu.memory_space<any>>
      tpu.enqueue_dma source(%14 : memref<16x128xbf16, #tpu.memory_space<any>>) target(%arg11 : memref<16x128xbf16, #tpu.memory_space<vmem>>) target_semaphore(%arg12 : memref<!tpu.dma_semaphore, #tpu.memory_space<semaphore_mem>>)
      %c0_i32_8 = arith.constant 0 : i32
      %15 = tpu.memref_slice %arg2[%1, %c0_i32_8] : memref<16x128xbf16, #tpu.memory_space<any>> -> memref<16x128xbf16, #tpu.memory_space<any>>
      tpu.wait_dma2 semaphore(%arg12 : memref<!tpu.dma_semaphore, #tpu.memory_space<semaphore_mem>>) src(%15 : memref<16x128xbf16, #tpu.memory_space<any>>) dst(%arg11 : memref<16x128xbf16, #tpu.memory_space<vmem>>)
      %c0_9 = arith.constant 0 : index
      %c0_10 = arith.constant 0 : index
      %16 = vector.load %arg11[%c0_9, %c0_10] : memref<16x128xbf16, #tpu.memory_space<vmem>>, vector<16x128xbf16>
      %c0_11 = arith.constant 0 : index
      %c0_12 = arith.constant 0 : index
      %17 = vector.load %arg3[%c0_11, %c0_12] : memref<128x128xbf16, #tpu.memory_space<vmem>>, vector<128x128xbf16>
      %cst_13 = arith.constant dense<0.000000e+00> : vector<16x128xf32>
      %18 = tpu.matmul %16, %17, %cst_13 {dimension_numbers = #tpu.dot_dimension_numbers<[1], [0], [0], [1], [0, 0, 1, 1], [], []>} : vector<16x128xbf16>, vector<128x128xbf16>, vector<16x128xf32> -> vector<16x128xf32>
      %c0_14 = arith.constant 0 : index
      %c0_15 = arith.constant 0 : index
      %19 = vector.load %arg4[%c0_14, %c0_15] : memref<1x128xf32, #tpu.memory_space<vmem>>, vector<1x128xf32>
      %20 = vector.broadcast %19 : vector<1x128xf32> to vector<16x128xf32>
      %21 = arith.addf %18, %20 : vector<16x128xf32>
      %cst_16 = arith.constant 5.000000e-01 : f32
      %22 = vector.broadcast %cst_16 : f32 to vector<16x128xf32>
      %23 = arith.mulf %22, %21 : vector<16x128xf32>
      %cst_17 = arith.constant 0.707106769 : f32
      %24 = vector.broadcast %cst_17 : f32 to vector<16x128xf32>
      %25 = arith.mulf %21, %24 : vector<16x128xf32>
      %26 = math.erf %25 : vector<16x128xf32>
      %cst_18 = arith.constant 1.000000e+00 : f32
      %27 = vector.broadcast %cst_18 : f32 to vector<16x128xf32>
      %28 = arith.addf %27, %26 : vector<16x128xf32>
      %29 = arith.mulf %23, %28 : vector<16x128xf32>
      %cst_19 = arith.constant dense<0.000000e+00> : vector<16xf32>
      %30 = vector.multi_reduction <add>, %29, %cst_19 [1] : vector<16x128xf32> to vector<16xf32>
      %31 = vector.shape_cast %30 : vector<16xf32> to vector<16x1xf32>
      %cst_20 = arith.constant 1.280000e+02 : f32
      %32 = vector.broadcast %cst_20 : f32 to vector<16x1xf32>
      %33 = arith.divf %31, %32 : vector<16x1xf32>
      %34 = vector.broadcast %33 : vector<16x1xf32> to vector<16x128xf32>
      %35 = arith.subf %29, %34 : vector<16x128xf32>
      %36 = vector.broadcast %33 : vector<16x1xf32> to vector<16x128xf32>
      %37 = arith.subf %29, %36 : vector<16x128xf32>
      %38 = arith.mulf %35, %37 : vector<16x128xf32>
      %cst_21 = arith.constant dense<0.000000e+00> : vector<16xf32>
      %39 = vector.multi_reduction <add>, %38, %cst_21 [1] : vector<16x128xf32> to vector<16xf32>
      %40 = vector.shape_cast %39 : vector<16xf32> to vector<16x1xf32>
      %cst_22 = arith.constant 1.280000e+02 : f32
      %41 = vector.broadcast %cst_22 : f32 to vector<16x1xf32>
      %42 = arith.divf %40, %41 : vector<16x1xf32>
      %43 = vector.broadcast %33 : vector<16x1xf32> to vector<16x128xf32>
      %44 = arith.subf %29, %43 : vector<16x128xf32>
      %cst_23 = arith.constant 9.99999996E-13 : f32
      %45 = vector.broadcast %cst_23 : f32 to vector<16x1xf32>
      %46 = arith.addf %42, %45 : vector<16x1xf32>
      %47 = math.rsqrt %46 : vector<16x1xf32>
      %48 = vector.broadcast %47 : vector<16x1xf32> to vector<16x128xf32>
      %49 = arith.mulf %44, %48 : vector<16x128xf32>
      %c0_24 = arith.constant 0 : index
      %c0_25 = arith.constant 0 : index
      %50 = vector.load %arg5[%c0_24, %c0_25] : memref<1x128xf32, #tpu.memory_space<vmem>>, vector<1x128xf32>
      %51 = vector.broadcast %50 : vector<1x128xf32> to vector<16x128xf32>
      %52 = arith.mulf %49, %51 : vector<16x128xf32>
      %c0_26 = arith.constant 0 : index
      %c0_27 = arith.constant 0 : index
      %53 = vector.load %arg6[%c0_26, %c0_27] : memref<1x128xf32, #tpu.memory_space<vmem>>, vector<1x128xf32>
      %54 = vector.broadcast %53 : vector<1x128xf32> to vector<16x128xf32>
      %55 = arith.addf %52, %54 : vector<16x128xf32>
      %56 = arith.truncf %55 : vector<16x128xf32> to vector<16x128xbf16>
      %57 = arith.index_cast %1 : i32 to index
      %c0_28 = arith.constant 0 : index
      %58 = vector.load %arg10[%57, %c0_28] : memref<16x128xbf16, #tpu.memory_space<vmem>>, vector<16x128xbf16>
      tpu.vector_store %arg10[%57, %c0_28], %56 {strides = array<i32>} : memref<16x128xbf16, #tpu.memory_space<vmem>>, vector<16x128xbf16>,
    } else {
    }
    %5 = arith.index_cast %1 : i32 to index
    %c0 = arith.constant 0 : index
    %6 = vector.load %arg10[%5, %c0] : memref<16x128xbf16, #tpu.memory_space<vmem>>, vector<16x128xbf16>
    %c0_1 = arith.constant 0 : index
    %c0_2 = arith.constant 0 : index
    %7 = vector.load %arg7[%c0_1, %c0_2] : memref<128x256xbf16, #tpu.memory_space<vmem>>, vector<128x256xbf16>
    %cst = arith.constant dense<0.000000e+00> : vector<16x256xf32>
    %8 = tpu.matmul %6, %7, %cst {dimension_numbers = #tpu.dot_dimension_numbers<[1], [0], [0], [1], [0, 0, 1, 1], [], []>} : vector<16x128xbf16>, vector<128x256xbf16>, vector<16x256xf32> -> vector<16x256xf32>
    %c0_3 = arith.constant 0 : index
    %c0_4 = arith.constant 0 : index
    %9 = vector.load %arg8[%c0_3, %c0_4] : memref<1x256xf32, #tpu.memory_space<vmem>>, vector<1x256xf32>
    %10 = vector.broadcast %9 : vector<1x256xf32> to vector<16x256xf32>
    %11 = arith.addf %8, %10 : vector<16x256xf32>
    %12 = arith.truncf %11 : vector<16x256xf32> to vector<16x256xbf16>
    %c0_5 = arith.constant 0 : index
    %c0_6 = arith.constant 0 : index
    %13 = vector.load %arg9[%c0_5, %c0_6] : memref<16x256xbf16, #tpu.memory_space<vmem>>, vector<16x256xbf16>
    tpu.vector_store %arg9[%c0_5, %c0_6], %12 {strides = array<i32>} : memref<16x256xbf16, #tpu.memory_space<vmem>>, vector<16x256xbf16>,
    return
  }
  func.func @transform_1(%arg0: i32, %arg1: i32) -> (i32, i32) {
    %c0_i32 = arith.constant 0 : i32
    %c0_i32_0 = arith.constant 0 : i32
    %c0_i32_1 = arith.constant 0 : i32
    return %c0_i32, %c0_i32_0 : i32, i32
  }
  func.func @transform_2(%arg0: i32, %arg1: i32) -> (i32, i32) {
    %c0_i32 = arith.constant 0 : i32
    %c0_i32_0 = arith.constant 0 : i32
    %c0_i32_1 = arith.constant 0 : i32
    return %c0_i32, %c0_i32_0 : i32, i32
  }
  func.func @transform_3(%arg0: i32, %arg1: i32) -> (i32, i32) {
    %c0_i32 = arith.constant 0 : i32
    %c0_i32_0 = arith.constant 0 : i32
    %c0_i32_1 = arith.constant 0 : i32
    return %c0_i32, %c0_i32_0 : i32, i32
  }
  func.func @transform_4(%arg0: i32, %arg1: i32) -> (i32, i32) {
    %c0_i32 = arith.constant 0 : i32
    %c0_i32_0 = arith.constant 0 : i32
    %c0_i32_1 = arith.constant 0 : i32
    return %c0_i32, %c0_i32_0 : i32, i32
  }
  func.func @transform_5(%arg0: i32, %arg1: i32) -> (i32, i32) {
    %c0_i32 = arith.constant 0 : i32
    %c0_i32_0 = arith.constant 0 : i32
    return %c0_i32, %arg0 : i32, i32
  }
  func.func @transform_6(%arg0: i32, %arg1: i32) -> (i32, i32) {
    %c0_i32 = arith.constant 0 : i32
    %c0_i32_0 = arith.constant 0 : i32
    return %c0_i32, %arg0 : i32, i32
  }
  func.func @transform_7(%arg0: i32, %arg1: i32) -> (i32, i32) {
    %c0_i32 = arith.constant 0 : i32
    return %arg1, %arg0 : i32, i32
  }
}

</mosaic_0001>

<llo_original>
// kernel: bert_lm_prediction_head.1
$region0: #{bert_lm_prediction_head.1}
  #allocation0 [shape = 'u32[]', space=smem, size = 0x4, offset = 0x4, fixed_abs, tag = 'smem constant byte address 0x4 - core index']
  #allocation1 [shape = 'u32[144,128]{1,0:T(1,128)}', space=vmem, size = 0x12000, scoped, tag = 'internal scratch']
  #allocation2 [shape = 'bf16[16,128]{1,0:T(16,128)(2,1)}', space=vmem, size = 0x1000, scoped, tag = 'scratch operand']
  #allocation3 [shape = 'bf16[16,128]{1,0:T(16,128)(2,1)}', space=vmem, size = 0x1000, scoped, tag = 'scratch operand']
  #allocation4 [shape = 's32[1]{0}', space=sflag, size = 0x4, scoped, tag = 'scratch operand']
  #allocation7 [shape = 's32[]', space=sflag, size = 0x4, offset = 0, fixed_abs, tag = 'sflag constant byte address 0x0 - dummy sync flag']
  %s0 = inlined_call_operand.vmem [shape: bf16[16,128], index: 0, kind: input, shape index: {}]
  %s1 = inlined_call_operand.vmem [shape: bf16[128,128], index: 1, kind: input, shape index: {}]
  %s2 = inlined_call_operand.vmem [shape: f32[1,128], index: 2, kind: input, shape index: {}]
  %s3 = inlined_call_operand.vmem [shape: f32[1,128], index: 3, kind: input, shape index: {}]
  %s4 = inlined_call_operand.vmem [shape: f32[1,128], index: 4, kind: input, shape index: {}]
  %s5 = inlined_call_operand.vmem [shape: bf16[128,256], index: 5, kind: input, shape index: {}]
  %s6 = inlined_call_operand.vmem [shape: f32[1,256], index: 6, kind: input, shape index: {}]
  %s7 = inlined_call_operand.hbm [shape: bf16[16,256], index: 7, kind: output, shape index: {}]
  %s8 = sld [smem:[#allocation0]]
  $region72: #{bert_lm_prediction_head.1} parent=0
    _
  %s10 = ssub.s32 1, %s8
  %s11 = scalar_select 0, %s10, %s8
  $region1: #{bert_lm_prediction_head.1} parent=0
    #allocation5 [shape = 'u8[8192]{0}', space=vmem, size = 0x2000, scoped, tag = 'output window, operand 0, single buffered']
    #allocation6 [shape = 's32[1]{0}', space=sflag, size = 0x4, scoped, tag = 'scoped memory for bert_lm_prediction_head.1']
    %12 = vsyncpa [#allocation6], 0
    // Predicated region
    $region2: #{bert_lm_prediction_head.1} parent=1 // pred_check
      _
    $region3: #{bert_lm_prediction_head.1} parent=1 // pred_check_branch
      %14 = sbr.rel (0) target = $region5
    $region4: #{bert_lm_prediction_head.1} parent=1 // pred_region
      _
    $region5: #{bert_lm_prediction_head.1} parent=1 // pred_fallthru
      _
    // Predicated region
    $region6: #{bert_lm_prediction_head.1} parent=1 // pred_check
      _
    $region7: #{bert_lm_prediction_head.1} parent=1 // pred_check_branch
      %16 = sbr.rel (0) target = $region9
    $region8: #{bert_lm_prediction_head.1} parent=1 // pred_region
      _
    $region9: #{bert_lm_prediction_head.1} parent=1 // pred_fallthru
      _
    // Predicated region
    $region10: #{bert_lm_prediction_head.1} parent=1 // pred_check
      _
    $region11: #{bert_lm_prediction_head.1} parent=1 // pred_check_branch
      %18 = sbr.rel (0) target = $region13
    $region12: #{bert_lm_prediction_head.1} parent=1 // pred_region
      _
    $region13: #{bert_lm_prediction_head.1} parent=1 // pred_fallthru
      _
    // Predicated region
    $region14: #{bert_lm_prediction_head.1} parent=1 // pred_check
      _
    $region15: #{bert_lm_prediction_head.1} parent=1 // pred_check_branch
      %20 = sbr.rel (0) target = $region17
    $region16: #{bert_lm_prediction_head.1} parent=1 // pred_region
      _
    $region17: #{bert_lm_prediction_head.1} parent=1 // pred_fallthru
      _
    // Predicated region
    $region18: #{bert_lm_prediction_head.1} parent=1 // pred_check
      _
    $region19: #{bert_lm_prediction_head.1} parent=1 // pred_check_branch
      %22 = sbr.rel (0) target = $region21
    $region20: #{bert_lm_prediction_head.1} parent=1 // pred_region
      _
    $region21: #{bert_lm_prediction_head.1} parent=1 // pred_fallthru
      _
    // Predicated region
    $region22: #{bert_lm_prediction_head.1} parent=1 // pred_check
      _
    $region23: #{bert_lm_prediction_head.1} parent=1 // pred_check_branch
      %24 = sbr.rel (0) target = $region25
    $region24: #{bert_lm_prediction_head.1} parent=1 // pred_region
      _
    $region25: #{bert_lm_prediction_head.1} parent=1 // pred_fallthru
      _
    %s26 = smul.u32 0, 16
    %p27 = scmp.eq.s32.totalorder 0, 0
    // Predicated region
    $region26: #{bert_lm_prediction_head.1} parent=1 // pred_check
      %p28 = pneg %p27
    $region27: #{bert_lm_prediction_head.1} parent=1 // pred_check_branch
      %30 = sbr.rel (%p28) target = $region29
    $region28: #{bert_lm_prediction_head.1} parent=1 // pred_region
      %s31 = sshra.s32 %s26, 3
      %s32 = sand.u32 %s26, 7
      %s33 = smul.addr %s31, 4
      %s34 = scalar_lea.vmem %s0, %s33
      %p36 = scmp.lt.u32.totalorder 8, 8
      %p37 = pneg %p36
      // Predicated region
      $region30: #{bert_lm_prediction_head.1} parent=28 // pred_check
        _
      $region31: #{bert_lm_prediction_head.1} parent=28 // pred_check_branch
        %39 = sbr.rel (%p36) target = $region33
      $region32: #{bert_lm_prediction_head.1} parent=28 // pred_region
        %s54 = sand.u32 8, 7
        %p55 = scmp.eq.s32.totalorder %s54, 0
        // Predicated region
        $region45: #{bert_lm_prediction_head.1} parent=32 // pred_check
          %p56 = pneg %p55
        $region46: #{bert_lm_prediction_head.1} parent=32 // pred_check_branch
          %58 = sbr.rel (%p56) target = $region48
        $region47: #{bert_lm_prediction_head.1} parent=32 // pred_region
          loop: start=0, step=1, limit=1
          $region49: #{bert_lm_prediction_head.1} parent=47 // loop_pre_header
            _
          $region50: #{bert_lm_prediction_head.1} parent=47 // loop_header
            %s60 = sphi 0, %s64
            %p61 = scmp.ge.s32.totalorder %s60, 1
            %s65 = sphi %s34, %s34
            %s66 = sphi [#allocation3], [#allocation3]
          $region51: #{bert_lm_prediction_head.1} parent=47 // loop_header_branch
            %63 = sbr.rel (%p61) target = $region55
          $region52: #{bert_lm_prediction_head.1} parent=47 // loop_body
            %v67 = vld [vmem:[%s65] sm:$0xff]
            %68 = vst [vmem:[%s66] sm:$0xff] %v67
          $region53: #{bert_lm_prediction_head.1} parent=47 // loop_footer
            %s64 = sadd.s32 1, %s60
          $region54: #{bert_lm_prediction_head.1} parent=47 // loop_footer_branch
            %59 = sbr.rel target = $region50
          $region55: #{bert_lm_prediction_head.1} parent=47 // loop_exit
            _
        $region48: #{bert_lm_prediction_head.1} parent=32 // pred_fallthru
          _
        %p69 = pneg %p55
        // Predicated region
        $region56: #{bert_lm_prediction_head.1} parent=32 // pred_check
          _
        $region57: #{bert_lm_prediction_head.1} parent=32 // pred_check_branch
          %71 = sbr.rel (%p55) target = $region59
        $region58: #{bert_lm_prediction_head.1} parent=32 // pred_region
          %s72 = sand.u32 8, 7
        $region59: #{bert_lm_prediction_head.1} parent=32 // pred_fallthru
          _
      $region33: #{bert_lm_prediction_head.1} parent=28 // pred_fallthru
        _
      // Predicated region
      $region34: #{bert_lm_prediction_head.1} parent=28 // pred_check
        %p40 = pneg %p36
      $region35: #{bert_lm_prediction_head.1} parent=28 // pred_check_branch
        %42 = sbr.rel (%p40) target = $region37
      $region36: #{bert_lm_prediction_head.1} parent=28 // pred_region
        %s43 = sshllo.u32 0, 8
        loop: start=0, step=1, limit=1
        $region38: #{bert_lm_prediction_head.1} parent=36 // loop_pre_header
          _
        $region39: #{bert_lm_prediction_head.1} parent=36 // loop_header
          %s45 = sphi 0, %s49
          %p46 = scmp.ge.s32.totalorder %s45, 1
          %s50 = sphi %s34, %s34
          %s51 = sphi [#allocation3], [#allocation3]
        $region40: #{bert_lm_prediction_head.1} parent=36 // loop_header_branch
          %48 = sbr.rel (%p46) target = $region44
        $region41: #{bert_lm_prediction_head.1} parent=36 // loop_body
          %v52 = vld [vmem:[%s50] sm:%s43]
          %53 = vst [vmem:[%s51] sm:%s43] %v52
        $region42: #{bert_lm_prediction_head.1} parent=36 // loop_footer
          %s49 = sadd.s32 1, %s45
        $region43: #{bert_lm_prediction_head.1} parent=36 // loop_footer_branch
          %44 = sbr.rel target = $region39
        $region44: #{bert_lm_prediction_head.1} parent=36 // loop_exit
          _
      $region37: #{bert_lm_prediction_head.1} parent=28 // pred_fallthru
        _
      // Predicated region
      $region60: #{bert_lm_prediction_head.1} parent=28 // pred_check
        _
      $region61: #{bert_lm_prediction_head.1} parent=28 // pred_check_branch
        %75 = sbr.rel (0) target = $region63
      $region62: #{bert_lm_prediction_head.1} parent=28 // pred_region
        %76 = vsyncadd [#allocation4], 128
      $region63: #{bert_lm_prediction_head.1} parent=28 // pred_fallthru
        _
      %s77 = smul.u32 4, 2
      %s78 = smul.u32 %s77, 1
      %s79 = sshll.u32 %s78, 4
      %80 = dma.done [#allocation4], %s79
      %v81 = vld [vmem:[#allocation3] sm:$0xff]
      %v82 = vld [vmem:[%s1] sm:$0xf]
      %v83 = vld [vmem:[%s1 + $0x4] sm:$0xf]
      %v84 = vld [vmem:[%s1 + $0x8] sm:$0xf]
      %v85 = vld [vmem:[%s1 + $0xc] sm:$0xf]
      %v86 = vld [vmem:[%s1 + $0x10] sm:$0xf]
      %v87 = vld [vmem:[%s1 + $0x14] sm:$0xf]
      %v88 = vld [vmem:[%s1 + $0x18] sm:$0xf]
      %v89 = vld [vmem:[%s1 + $0x1c] sm:$0xf]
      %v90 = vld [vmem:[%s1 + $0x20] sm:$0xf]
      %v91 = vld [vmem:[%s1 + $0x24] sm:$0xf]
      %v92 = vld [vmem:[%s1 + $0x28] sm:$0xf]
      %v93 = vld [vmem:[%s1 + $0x2c] sm:$0xf]
      %v94 = vld [vmem:[%s1 + $0x30] sm:$0xf]
      %v95 = vld [vmem:[%s1 + $0x34] sm:$0xf]
      %v96 = vld [vmem:[%s1 + $0x38] sm:$0xf]
      %v97 = vld [vmem:[%s1 + $0x3c] sm:$0xf]
      %v98 = vld [vmem:[%s2] sm:$0x1]
      %v100 = vlaneseq
      %v101 = vshrl.u32 %v100, 7
      %v102 = vsub.s32 0, %v101
      %v103 = vrot.slane %v98, %v102
      %v121 = vunpack.c.l.b16 %v82
      %v122 = vunpack.c.l.b16 %v83
      %v123 = vunpack.c.l.b16 %v84
      %v124 = vunpack.c.l.b16 %v85
      %v125 = vunpack.c.l.b16 %v86
      %v126 = vunpack.c.l.b16 %v87
      %v127 = vunpack.c.l.b16 %v88
      %v128 = vunpack.c.l.b16 %v89
      %v129 = vunpack.c.l.b16 %v90
      %v130 = vunpack.c.l.b16 %v91
      %v131 = vunpack.c.l.b16 %v92
      %v132 = vunpack.c.l.b16 %v93
      %v133 = vunpack.c.l.b16 %v94
      %v134 = vunpack.c.l.b16 %v95
      %v135 = vunpack.c.l.b16 %v96
      %v136 = vunpack.c.l.b16 %v97
      %v137 = vpack.c.b16 %v122, %v121
      %v138 = vpack.c.b16 %v124, %v123
      %v139 = vpack.c.b16 %v126, %v125
      %v140 = vpack.c.b16 %v128, %v127
      %v141 = vpack.c.b16 %v130, %v129
      %v142 = vpack.c.b16 %v132, %v131
      %v143 = vpack.c.b16 %v134, %v133
      %v144 = vpack.c.b16 %v136, %v135
      %153 = vmatprep.subr.bf16.mxu0 0
      %154 = vmatpush1.bf16.msra.mxu0 %v137
      %155 = vmatprep.subr.bf16.mxu0 0
      %156 = vmatpush1.bf16.msra.mxu0 %v138
      %157 = vmatprep.subr.bf16.mxu0 0
      %158 = vmatpush1.bf16.msra.mxu0 %v139
      %159 = vmatprep.subr.bf16.mxu0 0
      %160 = vmatpush1.bf16.msra.mxu0 %v140
      %161 = vmatprep.subr.bf16.mxu0 0
      %162 = vmatpush1.bf16.msra.mxu0 %v141
      %163 = vmatprep.subr.bf16.mxu0 0
      %164 = vmatpush1.bf16.msra.mxu0 %v142
      %165 = vmatprep.subr.bf16.mxu0 0
      %166 = vmatpush1.bf16.msra.mxu0 %v143
      %167 = vmatprep.subr.bf16.mxu0 0
      %168 = vmatpush1.bf16.msra.mxu0 %v144
      %169 = vmatprep.subr.bf16.mxu0 0
      %170 = vmatpush1.bf16.msra.mxu0 0
      %171 = vmatprep.subr.bf16.mxu0 0
      %172 = vmatpush1.bf16.msra.mxu0 0
      %173 = vmatprep.subr.bf16.mxu0 0
      %174 = vmatpush1.bf16.msra.mxu0 0
      %175 = vmatprep.subr.bf16.mxu0 0
      %176 = vmatpush1.bf16.msra.mxu0 0
      %177 = vmatprep.subr.bf16.mxu0 0
      %178 = vmatpush1.bf16.msra.mxu0 0
      %179 = vmatprep.subr.bf16.mxu0 0
      %180 = vmatpush1.bf16.msra.mxu0 0
      %181 = vmatprep.subr.bf16.mxu0 0
      %182 = vmatpush1.bf16.msra.mxu0 0
      %183 = vmatprep.subr.bf16.mxu0 0
      %184 = vmatpush1.bf16.msra.mxu0 0
      %185 = vmatprep.mubr.bf16.mxu0 0
      %186 = vmatmul.mubr.bf16.gmra.mrb[0].mxu0 %v81
      %v187 = vpop.f32.mrb[0].mxu0
      %v188 = vadd.f32 %v103, %v187
      %v189 = vpop.f32.mrb[0].mxu0
      %v190 = vpop.f32.mrb[0].mxu0
      %v191 = vadd.f32 %v103, %v190
      %v192 = vpop.f32.mrb[0].mxu0
      %193 = vdwg.mxu0
      %v194 = vmul.f32 %v188, 0.5
      %v195 = vmul.f32 %v191, 0.5
      %v196 = vmul.f32 %v188, 0.70710677
      %v197 = vmul.f32 %v191, 0.70710677
      %v198 = verf.f32.pop %v196
      %v199 = verf.f32.pop %v197
      %v200 = vadd.f32 %v198, 1.0
      %v201 = vadd.f32 %v199, 1.0
      %v202 = vmul.f32 %v194, %v200
      %v203 = vmul.f32 %v195, %v201
      %204 = vadd.xlane.f32.xlu0 %v202
      %v205 = vpop.xlane.xlu0 %204
      %206 = vadd.xlane.f32.xlu0 %v203
      %v207 = vpop.xlane.xlu0 %206
      %v208 = vrcp.pop 128.0
      %v209 = vmul.f32 %v205, %v208
      %v210 = vmul.f32 %v207, %v208
      %v211 = vsub.f32 %v202, %v209
      %v212 = vsub.f32 %v203, %v210
      %v213 = vmul.f32 %v211, %v211
      %v214 = vmul.f32 %v212, %v212
      %215 = vadd.xlane.f32.xlu0 %v213
      %v216 = vpop.xlane.xlu0 %215
      %217 = vadd.xlane.f32.xlu0 %v214
      %v218 = vpop.xlane.xlu0 %217
      %v219 = vmul.f32 %v216, %v208
      %v220 = vmul.f32 %v218, %v208
      %v221 = vadd.f32 %v219, 1e-12
      %v222 = vadd.f32 %v220, 1e-12
      %v223 = vrsqrt.pop %v221
      %v224 = vrsqrt.pop %v222
      %v225 = vmul.f32 %v211, %v223
      %v226 = vmul.f32 %v212, %v224
      %v227 = vld [vmem:[%s3] sm:$0x1]
      %v229 = vlaneseq
      %v230 = vshrl.u32 %v229, 7
      %v231 = vsub.s32 0, %v230
      %v232 = vrot.slane %v227, %v231
      %v234 = vmul.f32 %v225, %v232
      %v235 = vmul.f32 %v226, %v232
      %v236 = vld [vmem:[%s4] sm:$0x1]
      %v238 = vlaneseq
      %v239 = vshrl.u32 %v238, 7
      %v240 = vsub.s32 0, %v239
      %v241 = vrot.slane %v236, %v240
      %v243 = vadd.f32 %v234, %v241
      %v244 = vadd.f32 %v235, %v241
      %v245 = vpack.c.bf16 %v244, %v243
      %s246 = sshra.s32 %s26, 4
      %s247 = sand.u32 %s26, 15
      %s248 = smul.addr %s246, 8
      %s249 = scalar_lea.vmem [#allocation2], %s248
      %250 = vst [vmem:[%s249] sm:$0xff] %v245
    $region29: #{bert_lm_prediction_head.1} parent=1 // pred_fallthru
      _
    %s251 = sshra.s32 %s26, 4
    %s252 = sand.u32 %s26, 15
    %s253 = smul.addr %s251, 8
    %s254 = scalar_lea.vmem [#allocation2], %s253
    %v255 = vld [vmem:[%s254] sm:$0xff]
    %v256 = vld [vmem:[%s5] sm:$0xff]
    %v257 = vld [vmem:[%s5 + $0x8] sm:$0xff]
    %v258 = vld [vmem:[%s5 + $0x10] sm:$0xff]
    %v259 = vld [vmem:[%s5 + $0x18] sm:$0xff]
    %v260 = vld [vmem:[%s5 + $0x20] sm:$0xff]
    %v261 = vld [vmem:[%s5 + $0x28] sm:$0xff]
    %v262 = vld [vmem:[%s5 + $0x30] sm:$0xff]
    %v263 = vld [vmem:[%s5 + $0x38] sm:$0xff]
    %v264 = vld [vmem:[%s5 + $0x40] sm:$0xff]
    %v265 = vld [vmem:[%s5 + $0x48] sm:$0xff]
    %v266 = vld [vmem:[%s5 + $0x50] sm:$0xff]
    %v267 = vld [vmem:[%s5 + $0x58] sm:$0xff]
    %v268 = vld [vmem:[%s5 + $0x60] sm:$0xff]
    %v269 = vld [vmem:[%s5 + $0x68] sm:$0xff]
    %v270 = vld [vmem:[%s5 + $0x70] sm:$0xff]
    %v271 = vld [vmem:[%s5 + $0x78] sm:$0xff]
    %v272 = vld [vmem:[%s6] sm:$0x3]
    %v274 = vlaneseq
    %v275 = vshrl.u32 %v274, 7
    %v276 = vsub.s32 0, %v275
    %v277 = vrot.slane %v272, %v276
    %v278 = vlaneseq
    %v279 = vshrl.u32 %v278, 7
    %v280 = vsub.s32 1, %v279
    %v281 = vrot.slane %v272, %v280
    %v300 = vunpack.c.l.b16 %v256
    %v301 = vunpack.c.h.b16 %v256
    %v302 = vunpack.c.l.b16 %v257
    %v303 = vunpack.c.h.b16 %v257
    %v304 = vunpack.c.l.b16 %v258
    %v305 = vunpack.c.h.b16 %v258
    %v306 = vunpack.c.l.b16 %v259
    %v307 = vunpack.c.h.b16 %v259
    %v308 = vunpack.c.l.b16 %v260
    %v309 = vunpack.c.h.b16 %v260
    %v310 = vunpack.c.l.b16 %v261
    %v311 = vunpack.c.h.b16 %v261
    %v312 = vunpack.c.l.b16 %v262
    %v313 = vunpack.c.h.b16 %v262
    %v314 = vunpack.c.l.b16 %v263
    %v315 = vunpack.c.h.b16 %v263
    %v316 = vunpack.c.l.b16 %v264
    %v317 = vunpack.c.h.b16 %v264
    %v318 = vunpack.c.l.b16 %v265
    %v319 = vunpack.c.h.b16 %v265
    %v320 = vunpack.c.l.b16 %v266
    %v321 = vunpack.c.h.b16 %v266
    %v322 = vunpack.c.l.b16 %v267
    %v323 = vunpack.c.h.b16 %v267
    %v324 = vunpack.c.l.b16 %v268
    %v325 = vunpack.c.h.b16 %v268
    %v326 = vunpack.c.l.b16 %v269
    %v327 = vunpack.c.h.b16 %v269
    %v328 = vunpack.c.l.b16 %v270
    %v329 = vunpack.c.h.b16 %v270
    %v330 = vunpack.c.l.b16 %v271
    %v331 = vunpack.c.h.b16 %v271
    %v332 = vpack.c.b16 %v302, %v300
    %v333 = vpack.c.b16 %v303, %v301
    %v334 = vpack.c.b16 %v306, %v304
    %v335 = vpack.c.b16 %v307, %v305
    %v336 = vpack.c.b16 %v310, %v308
    %v337 = vpack.c.b16 %v311, %v309
    %v338 = vpack.c.b16 %v314, %v312
    %v339 = vpack.c.b16 %v315, %v313
    %v340 = vpack.c.b16 %v318, %v316
    %v341 = vpack.c.b16 %v319, %v317
    %v342 = vpack.c.b16 %v322, %v320
    %v343 = vpack.c.b16 %v323, %v321
    %v344 = vpack.c.b16 %v326, %v324
    %v345 = vpack.c.b16 %v327, %v325
    %v346 = vpack.c.b16 %v330, %v328
    %v347 = vpack.c.b16 %v331, %v329
    %364 = vmatprep.subr.bf16.mxu0 %v333
    %365 = vmatpush1.bf16.msra.mxu0 %v332
    %366 = vmatprep.subr.bf16.mxu0 %v335
    %367 = vmatpush1.bf16.msra.mxu0 %v334
    %368 = vmatprep.subr.bf16.mxu0 %v337
    %369 = vmatpush1.bf16.msra.mxu0 %v336
    %370 = vmatprep.subr.bf16.mxu0 %v339
    %371 = vmatpush1.bf16.msra.mxu0 %v338
    %372 = vmatprep.subr.bf16.mxu0 %v341
    %373 = vmatpush1.bf16.msra.mxu0 %v340
    %374 = vmatprep.subr.bf16.mxu0 %v343
    %375 = vmatpush1.bf16.msra.mxu0 %v342
    %376 = vmatprep.subr.bf16.mxu0 %v345
    %377 = vmatpush1.bf16.msra.mxu0 %v344
    %378 = vmatprep.subr.bf16.mxu0 %v347
    %379 = vmatpush1.bf16.msra.mxu0 %v346
    %380 = vmatprep.subr.bf16.mxu0 0
    %381 = vmatpush1.bf16.msra.mxu0 0
    %382 = vmatprep.subr.bf16.mxu0 0
    %383 = vmatpush1.bf16.msra.mxu0 0
    %384 = vmatprep.subr.bf16.mxu0 0
    %385 = vmatpush1.bf16.msra.mxu0 0
    %386 = vmatprep.subr.bf16.mxu0 0
    %387 = vmatpush1.bf16.msra.mxu0 0
    %388 = vmatprep.subr.bf16.mxu0 0
    %389 = vmatpush1.bf16.msra.mxu0 0
    %390 = vmatprep.subr.bf16.mxu0 0
    %391 = vmatpush1.bf16.msra.mxu0 0
    %392 = vmatprep.subr.bf16.mxu0 0
    %393 = vmatpush1.bf16.msra.mxu0 0
    %394 = vmatprep.subr.bf16.mxu0 0
    %395 = vmatpush1.bf16.msra.mxu0 0
    %396 = vmatprep.mubr.bf16.mxu0 0
    %397 = vmatmul.mubr.bf16.gmra.mrb[0].mxu0 %v255
    %v398 = vpop.f32.mrb[0].mxu0
    %v399 = vadd.f32 %v277, %v398
    %v400 = vpop.f32.mrb[0].mxu0
    %v401 = vadd.f32 %v281, %v400
    %v402 = vpop.f32.mrb[0].mxu0
    %v403 = vadd.f32 %v277, %v402
    %v404 = vpop.f32.mrb[0].mxu0
    %v405 = vadd.f32 %v281, %v404
    %406 = vdwg.mxu0
    %v407 = vpack.c.bf16 %v403, %v399
    %v408 = vpack.c.bf16 %v405, %v401
    %v411 = vunpack.c.l.b16 %v407
    %v412 = vunpack.c.l.b16 %v408
    %v413 = vunpack.c.h.b16 %v407
    %v414 = vunpack.c.h.b16 %v408
    %v415 = vpack.c.b16 %v412, %v411
    %v416 = vpack.c.b16 %v414, %v413
    %419 = vst [vmem:[#allocation5] sm:$0xff] %v415
    %420 = vst [vmem:[#allocation5 + $0x8] sm:$0xff] %v416
    // Predicated region
    $region64: #{bert_lm_prediction_head.1} parent=1 // pred_check
      _
    $region65: #{bert_lm_prediction_head.1} parent=1 // pred_check_branch
      %422 = sbr.rel (0) target = $region67
    $region66: #{bert_lm_prediction_head.1} parent=1 // pred_region
      %s424 = ssub.s32 256, 256
      %425 = vsyncadd [#allocation6], %s424
      %s426 = sshll.u32 [#allocation5], 4
      %s427 = int_to_ptr.vmem [resolvable:$true] %s426
      %432 = dma.vmem_to_hbm [thread:$0]  %s427, 256, %s7, [#allocation6], 128, 128, 8
    $region67: #{bert_lm_prediction_head.1} parent=1 // pred_fallthru
      _
    // Predicated region
    $region68: #{bert_lm_prediction_head.1} parent=1 // pred_check
      _
    $region69: #{bert_lm_prediction_head.1} parent=1 // pred_check_branch
      %434 = sbr.rel (0) target = $region71
    $region70: #{bert_lm_prediction_head.1} parent=1 // pred_region
      %435 = dma.done [#allocation6], 256
    $region71: #{bert_lm_prediction_head.1} parent=1 // pred_fallthru
      _
    %436 = vsyncpa [#allocation6], 1
  %437 = vsyncmov [#allocation4]
  %s438 = vpop.sfrf %437
  %p439 = scmp.eq.s32.totalorder %s438, 0
  %p440 = pneg %p439
  %442 = shalt.err (%p440)

</llo_original>
